<compile_context>
chip_gen: v5e
topology: v5e:2x2
jax: 0.10.0
libtpu: 0.0.40
codegen_flags: <defaults>
</compile_context>

<pallas_src>
import functools

import jax
import jax.numpy as jnp
from jax.experimental import pallas as pl
from jax.experimental.pallas import tpu as pltpu


# Tunables. _TILE_BUDGET_BYTES is per x tile; double-buffered (x in + out) is ~4x
# this, i.e. ~8 MiB — safely inside the default scoped VMEM on v5e (16 MiB),
# v6e (32 MiB) and v7x (32 MiB scoped / 64 MiB physical).
_TILE_BUDGET_BYTES = 2 * 1024 * 1024
_TS_CAP = 16 * 1024          # spatial (lane) tile cap, multiple of 128
_TC_CAP = 64                 # channel (sublane) tile cap
_SMALL_BYTES = 1 << 20       # <= 1 MiB total -> one full (C, S) block per batch


def _inject_noise_kernel(x_ref, noise_ref, scale_ref, o_ref, *, tc):
    # x_ref/o_ref: (1, TC, TS); noise_ref: (1, 1, TS); scale_ref: (1, C, 1) resident.
    cb = pl.program_id(2)
    start = pl.multiple_of(cb * tc, tc)
    sc = scale_ref[:, pl.ds(start, tc), :]                       # (1, TC, 1)
    out = (x_ref[...].astype(jnp.float32)
           + sc.astype(jnp.float32) * noise_ref[...].astype(jnp.float32))
    o_ref[...] = out.astype(o_ref.dtype)


def _pick_channel_tile(c, base, cap):
    """Largest multiple of `base` that divides c, capped at `cap`; full c if none."""
    t = min((cap // base) * base, (c // base) * base)
    while t >= base:
        if c % t == 0:
            return t
        t -= base
    return c


def _pick_spatial_tile(s, tc, itemsize, budget, cap):
    """Multiple-of-128 spatial tile within the per-tile byte budget; full s if it fits."""
    ts = (budget // (tc * itemsize)) // 128 * 128
    ts = max(128, min(cap, ts))
    return s if s <= ts else ts     # full-dim block (always legal) or multiple of 128


def inject_noise(x, w, scale, noise):
    """x: (B, C, H, W); w: passed through; scale: (C,) or (C,1,1); noise: (B, 1, H, W)."""
    B, C, H, W = x.shape
    S = H * W
    itemsize = jnp.dtype(x.dtype).itemsize

    # Lane-dense spatial flattening: (B, C, H, W) -> (B, C, S).
    xf = x.reshape(B, C, S)
    nf = noise.reshape(B, 1, S)
    sf = jnp.asarray(scale).reshape(1, C, 1)

    if B * C * S * itemsize <= _SMALL_BYTES:
        # Small-shape fast path: one full (C, S) block per batch element.
        TC, TS = C, S
    else:
        base_c = {1: 32, 2: 16, 4: 8}.get(itemsize, 8)
        TC = _pick_channel_tile(C, base_c, _TC_CAP)
        TS = _pick_spatial_tile(S, TC, itemsize, _TILE_BUDGET_BYTES, _TS_CAP)

    # Grid: spatial leading (even v7x 2-TC split when B == 1), batch, channel
    # innermost so the noise tile's block index is unchanged across channel steps
    # (Pallas skips the re-DMA -> noise read once per (spatial, batch) tile).
    grid = (pl.cdiv(S, TS), B, pl.cdiv(C, TC))

    out_flat = pl.pallas_call(
        functools.partial(_inject_noise_kernel, tc=TC),
        out_shape=jax.ShapeDtypeStruct((B, C, S), x.dtype),
        grid=grid,
        in_specs=[
            pl.BlockSpec((1, TC, TS), lambda sb, b, cb: (b, cb, sb)),   # x
            pl.BlockSpec((1, 1, TS), lambda sb, b, cb: (b, 0, sb)),     # noise
            pl.BlockSpec((1, C, 1), lambda sb, b, cb: (0, 0, 0)),       # scale (resident)
        ],
        out_specs=pl.BlockSpec((1, TC, TS), lambda sb, b, cb: (b, cb, sb)),
        compiler_params=pltpu.CompilerParams(
            dimension_semantics=("parallel", "parallel", "parallel")),
    )(xf, nf, sf)

    return out_flat.reshape(B, C, H, W), w


if __name__ == "__main__":
    def _reference(x, scale, noise):
        s = jnp.asarray(scale).reshape(1, -1, 1, 1).astype(jnp.float32)
        return (x.astype(jnp.float32) + s * noise.astype(jnp.float32)).astype(x.dtype)

    def _check(B, C, H, dtype, key):
        kx, kw, kn, ks = jax.random.split(key, 4)
        x = jax.random.normal(kx, (B, C, H, H), dtype=jnp.float32).astype(dtype)
        w = jax.random.normal(kw, (B, 32), dtype=jnp.float32)
        noise = jax.random.normal(kn, (B, 1, H, H), dtype=jnp.float32)
        scale = 0.1 * jax.random.normal(ks, (C,), dtype=jnp.float32)

        out, w_out = inject_noise(x, w, scale, noise)
        out = jax.block_until_ready(out)
        w_out = jax.block_until_ready(w_out)

        ref = _reference(x, scale, noise)
        tol = 1e-2 if dtype == jnp.bfloat16 else 1e-5
        assert out.shape == x.shape and out.dtype == x.dtype
        assert jnp.allclose(out.astype(jnp.float32), ref.astype(jnp.float32),
                            atol=tol, rtol=tol), f"mismatch for {(B, C, H, dtype)}"
        assert jnp.array_equal(w_out, w), "w must pass through unchanged"

    master = jax.random.PRNGKey(0)
    k0, k1, k2 = jax.random.split(master, 3)

    # 1) Small-shape fast path (the module's nominal test config).
    _check(2, 4, 16, jnp.float32, k0)
    # 2) Tiled path with a masked partial trailing spatial block (S = 91*91 = 8281,
    #    not a multiple of 128): exercises the budgeted TS + pl.cdiv grid.
    _check(2, 64, 91, jnp.float32, k1)
    # 3) bf16 activations (f32 compute, cast on store) through the fast path.
    _check(2, 8, 16, jnp.bfloat16, k2)

    print("KERNEL_OK")
</pallas_src>

<mosaic_0001>
module attributes {stable_mosaic.version = 11 : i64} {
  func.func @_inject_noise_kernel(%arg0: i32, %arg1: i32, %arg2: i32, %arg3: memref<1x4x256xf32, #tpu.memory_space<vmem>>, %arg4: memref<1x1x256xf32, #tpu.memory_space<vmem>>, %arg5: memref<1x4x1xf32, #tpu.memory_space<vmem>>, %arg6: memref<1x4x256xf32, #tpu.memory_space<vmem>>) attributes {dimension_semantics = [#tpu.dimension_semantics<parallel>, #tpu.dimension_semantics<parallel>, #tpu.dimension_semantics<parallel>], iteration_bounds = array<i64: 1, 2, 1>, scalar_prefetch = 0 : i64, scratch_operands = 0 : i64, tpu.core_type = #tpu.core_type<tc>, window_params = [{transform_indices = @transform_0, window_bounds = array<i64: 1, 4, 256>}, {transform_indices = @transform_1, window_bounds = array<i64: 1, 1, 256>}, {pipeline_mode = #tpu.pipeline_mode<synchronous>, transform_indices = @transform_2, window_bounds = array<i64: 1, 4, 1>}, {transform_indices = @transform_3, window_bounds = array<i64: 1, 4, 256>}]} {
    %c4_i32 = arith.constant 4 : i32
    %0 = arith.muli %arg2, %c4_i32 : i32
    %1 = tpu.assume_multiple %0, 4 : i32
    %c0 = arith.constant 0 : index
    %2 = arith.index_cast %1 : i32 to index
    %c0_0 = arith.constant 0 : index
    %3 = vector.load %arg5[%c0, %2, %c0_0] : memref<1x4x1xf32, #tpu.memory_space<vmem>>, vector<1x4x1xf32>
    %c0_1 = arith.constant 0 : index
    %c0_2 = arith.constant 0 : index
    %c0_3 = arith.constant 0 : index
    %4 = vector.load %arg3[%c0_1, %c0_2, %c0_3] : memref<1x4x256xf32, #tpu.memory_space<vmem>>, vector<1x4x256xf32>
    %c0_4 = arith.constant 0 : index
    %c0_5 = arith.constant 0 : index
    %c0_6 = arith.constant 0 : index
    %5 = vector.load %arg4[%c0_4, %c0_5, %c0_6] : memref<1x1x256xf32, #tpu.memory_space<vmem>>, vector<1x1x256xf32>
    %6 = vector.broadcast %3 : vector<1x4x1xf32> to vector<1x4x256xf32>
    %7 = vector.broadcast %5 : vector<1x1x256xf32> to vector<1x4x256xf32>
    %8 = arith.mulf %6, %7 : vector<1x4x256xf32>
    %9 = arith.addf %4, %8 : vector<1x4x256xf32>
    %c0_7 = arith.constant 0 : index
    %c0_8 = arith.constant 0 : index
    %c0_9 = arith.constant 0 : index
    %10 = vector.load %arg6[%c0_7, %c0_8, %c0_9] : memref<1x4x256xf32, #tpu.memory_space<vmem>>, vector<1x4x256xf32>
    tpu.vector_store %arg6[%c0_7, %c0_8, %c0_9], %9 {strides = array<i32>} : memref<1x4x256xf32, #tpu.memory_space<vmem>>, vector<1x4x256xf32>,
    return
  }
  func.func @transform_0(%arg0: i32, %arg1: i32, %arg2: i32) -> (i32, i32, i32) {
    %c0_i32 = arith.constant 0 : i32
    return %arg1, %arg2, %arg0 : i32, i32, i32
  }
  func.func @transform_1(%arg0: i32, %arg1: i32, %arg2: i32) -> (i32, i32, i32) {
    %c0_i32 = arith.constant 0 : i32
    %c0_i32_0 = arith.constant 0 : i32
    return %arg1, %c0_i32, %arg0 : i32, i32, i32
  }
  func.func @transform_2(%arg0: i32, %arg1: i32, %arg2: i32) -> (i32, i32, i32) {
    %c0_i32 = arith.constant 0 : i32
    %c0_i32_0 = arith.constant 0 : i32
    %c0_i32_1 = arith.constant 0 : i32
    %c0_i32_2 = arith.constant 0 : i32
    return %c0_i32, %c0_i32_0, %c0_i32_1 : i32, i32, i32
  }
  func.func @transform_3(%arg0: i32, %arg1: i32, %arg2: i32) -> (i32, i32, i32) {
    %c0_i32 = arith.constant 0 : i32
    return %arg1, %arg2, %arg0 : i32, i32, i32
  }
}

</mosaic_0001>

<llo_original>
// kernel: tpu_custom_call.1
$region0: #{tpu_custom_call.1}
  #allocation0 [shape = 'u32[]', space=smem, size = 0x4, offset = 0x4, fixed_abs, tag = 'smem constant byte address 0x4 - core index']
  #allocation1 [shape = 'u32[72,128]{1,0:T(1,128)}', space=vmem, size = 0x9000, scoped, tag = 'internal scratch']
  %s0 = inlined_call_operand.hbm [shape: f32[2,4,256], index: 0, kind: input, shape index: {}]
  %s1 = inlined_call_operand.vmem [shape: f32[2,1,256], index: 1, kind: input, shape index: {}]
  %s2 = inlined_call_operand.vmem [shape: f32[1,4,1], index: 2, kind: input, shape index: {}]
  %s3 = inlined_call_operand.hbm [shape: f32[2,4,256], index: 3, kind: output, shape index: {}]
  %s4 = sld [smem:[#allocation0]]
  $region49: #{tpu_custom_call.1} parent=0
    _
  %s6 = ssub.s32 1, %s4
  %s7 = scalar_select 0, %s6, %s4
  $region1: #{tpu_custom_call.1} parent=0
    #allocation2 [shape = 'u8[8192]{0}', space=vmem, size = 0x2000, scoped, tag = 'input window, operand 0']
    #allocation3 [shape = 's32[2]{0}', space=sflag, size = 0x8, scoped, tag = 'scoped memory for tpu_custom_call.1']
    #allocation4 [shape = 's32[2]{0}', space=sflag, size = 0x8, scoped, tag = 'scoped memory for tpu_custom_call.1']
    #allocation5 [shape = 'u8[8192]{0}', space=vmem, size = 0x2000, scoped, tag = 'output window, operand 0']
    %8 = vsyncpa [#allocation3], 0
    %s9 = scalar_lea.sflag [#allocation3], 1
    %10 = vsyncpa %s9, 0
    %11 = vsyncpa [#allocation4], 0
    %s12 = scalar_lea.sflag [#allocation4], 1
    %13 = vsyncpa %s12, 0
    loop: start=0, step=1, limit=4
    $region2: #{tpu_custom_call.1} parent=1 // loop_pre_header
      _
    $region3: #{tpu_custom_call.1} parent=1 // loop_header
      %s15 = sphi 0, %s19
      %p16 = scmp.ge.s32.totalorder %s15, 4
      %s22 = sphi 0, %s41
      %s23 = sphi 0, %s37
      %s24 = sphi 0, %s33
      %s25 = sphi 0, %s22
      %s26 = sphi 0, %s23
      %s27 = sphi 0, %s24
      %s28 = sphi 0, %s25
      %s29 = sphi 0, %s26
      %s30 = sphi 0, %s27
      %s48 = sphi 0, %s50
      %s51 = sphi 0, %s48
      %s52 = sphi 0, %s51
      %s68 = sphi 0, %s52
      %s76 = sphi 0, %s78
      %s79 = sphi 0, %s76
      %s80 = sphi 0, %s79
      %s96 = sphi 0, %s80
      %s100 = sphi 0, %s100
      %s102 = sphi 0, %s100
      %s103 = sphi 0, %s102
      %s117 = sphi 0, %s103
      %s127 = sphi 0, %s129
      %s130 = sphi 0, %s127
      %s131 = sphi 0, %s130
      %s147 = sphi 0, %s131
    $region4: #{tpu_custom_call.1} parent=1 // loop_header_branch
      %18 = sbr.rel (%p16) target = $region8
    $region5: #{tpu_custom_call.1} parent=1 // loop_body
      %s20 = ssub.s32 %s15, 1
      %s21 = ssub.s32 %s15, 2
      %s31 = sadd.s32 1, %s24
      %p32 = scmp.ge.s32.totalorder %s31, 1
      %s33 = scalar_select %p32, 0, %s31
      %s34 = sadd.s32 1, %s23
      %s35 = scalar_select %p32, %s34, %s23
      %p36 = scmp.ge.s32.totalorder %s35, 2
      %s37 = scalar_select %p36, 0, %s35
      %s38 = sadd.s32 1, %s22
      %s39 = scalar_select %p36, %s38, %s22
      %p40 = scmp.ge.s32.totalorder %s39, 1
      %s41 = scalar_select %p40, 0, %s39
      %s42 = ssub.s32 %s23, %s37
      %s43 = ssub.s32 %s24, %s33
      %s44 = sor.u32 %s42, %s43
      %s45 = ssub.s32 %s22, %s41
      %s46 = sor.u32 %s44, %s45
      %p47 = scmp.eq.s32.totalorder %s46, 0
      %s49 = sadd.s32 %s48, 1
      %s50 = scalar_select %p47, %s48, %s49
      %p53 = pneg %p47
      %p54 = scmp.eq.s32.totalorder %s15, 1
      %p55 = por %p53, %p54
      %p56 = scmp.ne.s32.totalorder %s48, %s51
      %p57 = scmp.eq.s32.totalorder %s15, 0
      %p58 = por %p56, %p57
      %p59 = scmp.ne.s32.totalorder %s48, %s51
      %p60 = scmp.eq.s32.totalorder %s20, 1
      %p61 = por %p59, %p60
      %p62 = scmp.ne.s32.totalorder %s51, %s52
      %p63 = scmp.eq.s32.totalorder %s20, 0
      %p64 = por %p62, %p63
      %p65 = scmp.ne.s32.totalorder %s51, %s52
      %p66 = scmp.eq.s32.totalorder %s21, 1
      %p67 = por %p65, %p66
      %p69 = scmp.ne.s32.totalorder %s52, %s68
      %p70 = scmp.eq.s32.totalorder %s21, 0
      %p71 = por %p69, %p70
      %s72 = ssub.s32 %s23, %s37
      %s73 = ssub.s32 %s22, %s41
      %s74 = sor.u32 %s72, %s73
      %p75 = scmp.eq.s32.totalorder %s74, 0
      %s77 = sadd.s32 %s76, 1
      %s78 = scalar_select %p75, %s76, %s77
      %p81 = pneg %p75
      %p82 = scmp.eq.s32.totalorder %s15, 1
      %p83 = por %p81, %p82
      %p84 = scmp.ne.s32.totalorder %s76, %s79
      %p85 = scmp.eq.s32.totalorder %s15, 0
      %p86 = por %p84, %p85
      %p87 = scmp.ne.s32.totalorder %s76, %s79
      %p88 = scmp.eq.s32.totalorder %s20, 1
      %p89 = por %p87, %p88
      %p90 = scmp.ne.s32.totalorder %s79, %s80
      %p91 = scmp.eq.s32.totalorder %s20, 0
      %p92 = por %p90, %p91
      %p93 = scmp.ne.s32.totalorder %s79, %s80
      %p94 = scmp.eq.s32.totalorder %s21, 1
      %p95 = por %p93, %p94
      %p97 = scmp.ne.s32.totalorder %s80, %s96
      %p98 = scmp.eq.s32.totalorder %s21, 0
      %p99 = por %p97, %p98
      %s101 = sadd.s32 %s100, 1
      %p104 = scmp.eq.s32.totalorder %s15, 1
      %p105 = scmp.ne.s32.totalorder %s100, %s102
      %p106 = scmp.eq.s32.totalorder %s15, 0
      %p107 = por %p105, %p106
      %p108 = scmp.ne.s32.totalorder %s100, %s102
      %p109 = scmp.eq.s32.totalorder %s20, 1
      %p110 = por %p108, %p109
      %p111 = scmp.ne.s32.totalorder %s102, %s103
      %p112 = scmp.eq.s32.totalorder %s20, 0
      %p113 = por %p111, %p112
      %p114 = scmp.ne.s32.totalorder %s102, %s103
      %p115 = scmp.eq.s32.totalorder %s21, 1
      %p116 = por %p114, %p115
      %p118 = scmp.ne.s32.totalorder %s103, %s117
      %p119 = scmp.eq.s32.totalorder %s21, 0
      %p120 = por %p118, %p119
      %s121 = ssub.s32 %s23, %s37
      %s122 = ssub.s32 %s24, %s33
      %s123 = sor.u32 %s121, %s122
      %s124 = ssub.s32 %s22, %s41
      %s125 = sor.u32 %s123, %s124
      %p126 = scmp.eq.s32.totalorder %s125, 0
      %s128 = sadd.s32 %s127, 1
      %s129 = scalar_select %p126, %s127, %s128
      %p132 = pneg %p126
      %p133 = scmp.eq.s32.totalorder %s15, 1
      %p134 = por %p132, %p133
      %p135 = scmp.ne.s32.totalorder %s127, %s130
      %p136 = scmp.eq.s32.totalorder %s15, 0
      %p137 = por %p135, %p136
      %p138 = scmp.ne.s32.totalorder %s127, %s130
      %p139 = scmp.eq.s32.totalorder %s20, 1
      %p140 = por %p138, %p139
      %p141 = scmp.ne.s32.totalorder %s130, %s131
      %p142 = scmp.eq.s32.totalorder %s20, 0
      %p143 = por %p141, %p142
      %p144 = scmp.ne.s32.totalorder %s130, %s131
      %p145 = scmp.eq.s32.totalorder %s21, 1
      %p146 = por %p144, %p145
      %p148 = scmp.ne.s32.totalorder %s131, %s147
      %p149 = scmp.eq.s32.totalorder %s21, 0
      %p150 = por %p148, %p149
      %p151 = scmp.le.s32.totalorder 1, %s15
      %p152 = scmp.lt.s32.totalorder %s15, 3
      %p153 = pnand %p151, %p152
      %p154 = pneg %p153
      // Predicated region
      $region9: #{tpu_custom_call.1} parent=5 // pred_check
        _
      $region10: #{tpu_custom_call.1} parent=5 // pred_check_branch
        %156 = sbr.rel (%p153) target = $region12
      $region11: #{tpu_custom_call.1} parent=5 // pred_region
        %s157 = ssub.s32 %s15, 1
        // Predicated region
        $region13: #{tpu_custom_call.1} parent=11 // pred_check
          %p158 = pneg %p113
        $region14: #{tpu_custom_call.1} parent=11 // pred_check_branch
          %160 = sbr.rel (%p158) target = $region16
        $region15: #{tpu_custom_call.1} parent=11 // pred_region
          _
        $region16: #{tpu_custom_call.1} parent=11 // pred_fallthru
          _
      $region12: #{tpu_custom_call.1} parent=5 // pred_fallthru
        _
      %p161 = scmp.lt.s32.totalorder %s15, 2
      // Predicated region
      $region17: #{tpu_custom_call.1} parent=5 // pred_check
        %p162 = pneg %p161
      $region18: #{tpu_custom_call.1} parent=5 // pred_check_branch
        %164 = sbr.rel (%p162) target = $region20
      $region19: #{tpu_custom_call.1} parent=5 // pred_region
        // Predicated region
        $region21: #{tpu_custom_call.1} parent=19 // pred_check
          %p165 = pneg %p58
        $region22: #{tpu_custom_call.1} parent=19 // pred_check_branch
          %167 = sbr.rel (%p165) target = $region24
        $region23: #{tpu_custom_call.1} parent=19 // pred_region
          %s168 = sand.u32 %s48, 1
          %s169 = scalar_lea.sflag [#allocation3], %s168
          %s170 = sand.u32 %s48, 1
          %s171 = smul.addr %s170, 8
          %s172 = scalar_lea.vmem [#allocation2], %s171
          %s173 = smul.u32 2, %s22
          %175 = vsyncadd %s169, 0
          %s176 = smul.addr %s24, 2
          %s177 = sadd.s32 %s173, %s176
          %s178 = smul.addr %s23, 2
          %s179 = sadd.s32 %s177, %s178
          %s180 = smul.addr %s179, 4
          %s181 = scalar_lea.hbm %s0, %s180
          %s183 = sshll.u32 %s181, 4
          %s184 = int_to_ptr.hbm [resolvable:$true] %s183
          %s185 = sshll.u32 %s172, 4
          %s186 = int_to_ptr.vmem [resolvable:$true] %s185
          %188 = dma.hbm_to_vmem [thread:$0]  %s184, 128, %s186, %s169
        $region24: #{tpu_custom_call.1} parent=19 // pred_fallthru
          _
        // Predicated region
        $region25: #{tpu_custom_call.1} parent=19 // pred_check
          %p189 = pneg %p86
        $region26: #{tpu_custom_call.1} parent=19 // pred_check_branch
          %191 = sbr.rel (%p189) target = $region28
        $region27: #{tpu_custom_call.1} parent=19 // pred_region
          %s192 = smul.u32 2, %s22
          %p193 = scmp.lt.s32.totalorder %s23, 1
          %s194 = scalar_select %p193, %s23, 1
          %p195 = scmp.lt.s32.totalorder %s192, 1
          %s196 = scalar_select %p195, %s192, 1
          %s197 = smul.addr %s194, 2
          %s198 = sadd.s32 %s196, %s197
          %s199 = scalar_lea.vmem %s1, %s198
          %s200 = smul.u32 2, %s22
        $region28: #{tpu_custom_call.1} parent=19 // pred_fallthru
          _
      $region20: #{tpu_custom_call.1} parent=5 // pred_fallthru
        _
      %p201 = scmp.le.s32.totalorder 1, %s15
      %p202 = scmp.lt.s32.totalorder %s15, 3
      %p203 = pnand %p201, %p202
      %p204 = pneg %p203
      // Predicated region
      $region29: #{tpu_custom_call.1} parent=5 // pred_check
        _
      $region30: #{tpu_custom_call.1} parent=5 // pred_check_branch
        %206 = sbr.rel (%p203) target = $region32
      $region31: #{tpu_custom_call.1} parent=5 // pred_region
        %s207 = ssub.s32 %s15, 1
        %s208 = sand.u32 %s51, 1
        %s209 = scalar_lea.sflag [#allocation3], %s208
        %s210 = sand.u32 %s51, 1
        %s211 = smul.addr %s210, 8
        %s212 = scalar_lea.vmem [#allocation2], %s211
        // Predicated region
        $region33: #{tpu_custom_call.1} parent=31 // pred_check
          %p213 = pneg %p64
        $region34: #{tpu_custom_call.1} parent=31 // pred_check_branch
          %215 = sbr.rel (%p213) target = $region36
        $region35: #{tpu_custom_call.1} parent=31 // pred_region
          %217 = dma.done %s209, 128
        $region36: #{tpu_custom_call.1} parent=31 // pred_fallthru
          _
        %s218 = sand.u32 %s51, 1
        %s219 = scalar_lea.sflag [#allocation3], %s218
        %s220 = sand.u32 %s51, 1
        %s221 = smul.addr %s220, 8
        %s222 = scalar_lea.vmem [#allocation2], %s221
        %p223 = pneg %p64
        %p224 = pneg %p61
        %s225 = smul.u32 2, %s25
        %p226 = scmp.lt.s32.totalorder %s26, 1
        %s227 = scalar_select %p226, %s26, 1
        %p228 = scmp.lt.s32.totalorder %s225, 1
        %s229 = scalar_select %p228, %s225, 1
        %s230 = smul.addr %s227, 2
        %s231 = sadd.s32 %s229, %s230
        %s232 = scalar_lea.vmem %s1, %s231
        %p233 = pneg %p92
        %p234 = pneg %p89
        %p235 = pneg %p113
        %p236 = pneg %p110
        %p237 = pneg %p143
        %p238 = pneg %p140
        %s239 = sand.u32 %s130, 1
        %s240 = scalar_lea.sflag [#allocation4], %s239
        %s241 = sand.u32 %s130, 1
        %s242 = smul.addr %s241, 8
        %s243 = scalar_lea.vmem [#allocation5], %s242
        %s244 = smul.u32 2, %s25
        %s245 = smul.u32 2, %s25
        %p246 = scmp.lt.s32.totalorder %s26, 1
        %s247 = scalar_select %p246, %s26, 1
        %p248 = scmp.lt.s32.totalorder %s245, 1
        %s249 = scalar_select %p248, %s245, 1
        %s250 = smul.addr %s247, 2
        %s251 = sadd.s32 %s249, %s250
        %s252 = scalar_lea.vmem %s1, %s251
        %s253 = smul.u32 2, %s25
        %s254 = smul.u32 2, %s25
        %s255 = smul.u32 %s27, 4
        %s256 = scalar_lea.vmem %s2, %s255
        %v257 = vld [vmem:[%s256] sm:$0xf]
        %v258 = vld [vmem:[%s212] sm:$0xff]
        %v259 = vld [vmem:[%s252] sm:$0x3]
        %261 = vset.pattern.permute.xlu0 0
        %262 = vperm.xlu0 %261, %v257
        %v263 = vpop.permute.xlu0 %262
        %v266 = vperm.slane %v259, 0
        %v267 = vperm.slane %v259, 1
        %v270 = vmul.f32 %v263, %v266
        %v271 = vmul.f32 %v263, %v267
        %v274 = vrot.slane %v271, 4
        %vm275 = vcmask 1043456
        %v276 = vsel %vm275, %v270, %v274
        %v278 = vadd.f32 %v258, %v276
        %279 = vst [vmem:[%s243] sm:$0xff] %v278
        %s280 = sand.u32 %s130, 1
        %s281 = scalar_lea.sflag [#allocation4], %s280
        %s282 = sand.u32 %s130, 1
        %s283 = smul.addr %s282, 8
        %s284 = scalar_lea.vmem [#allocation5], %s283
        // Predicated region
        $region37: #{tpu_custom_call.1} parent=31 // pred_check
          %p285 = pneg %p140
        $region38: #{tpu_custom_call.1} parent=31 // pred_check_branch
          %287 = sbr.rel (%p285) target = $region40
        $region39: #{tpu_custom_call.1} parent=31 // pred_region
          %s288 = smul.u32 2, %s25
          %290 = vsyncadd %s281, 0
          %s291 = smul.addr %s27, 2
          %s292 = sadd.s32 %s288, %s291
          %s293 = smul.addr %s26, 2
          %s294 = sadd.s32 %s292, %s293
          %s295 = smul.addr %s294, 4
          %s296 = scalar_lea.hbm %s3, %s295
          %s298 = sshll.u32 %s284, 4
          %s299 = int_to_ptr.vmem [resolvable:$true] %s298
          %s300 = sshll.u32 %s296, 4
          %s301 = int_to_ptr.hbm [resolvable:$true] %s300
          %303 = dma.vmem_to_hbm [thread:$0]  %s299, 128, %s301, %s281
        $region40: #{tpu_custom_call.1} parent=31 // pred_fallthru
          _
      $region32: #{tpu_custom_call.1} parent=5 // pred_fallthru
        _
      %p304 = scmp.le.s32.totalorder 2, %s15
      // Predicated region
      $region41: #{tpu_custom_call.1} parent=5 // pred_check
        %p305 = pneg %p304
      $region42: #{tpu_custom_call.1} parent=5 // pred_check_branch
        %307 = sbr.rel (%p305) target = $region44
      $region43: #{tpu_custom_call.1} parent=5 // pred_region
        %s308 = ssub.s32 %s15, 2
        // Predicated region
        $region45: #{tpu_custom_call.1} parent=43 // pred_check
          %p309 = pneg %p146
        $region46: #{tpu_custom_call.1} parent=43 // pred_check_branch
          %311 = sbr.rel (%p309) target = $region48
        $region47: #{tpu_custom_call.1} parent=43 // pred_region
          %s312 = sand.u32 %s131, 1
          %s313 = scalar_lea.sflag [#allocation4], %s312
          %s314 = sand.u32 %s131, 1
          %s315 = smul.addr %s314, 8
          %s316 = scalar_lea.vmem [#allocation5], %s315
          %318 = dma.done %s313, 128
        $region48: #{tpu_custom_call.1} parent=43 // pred_fallthru
          _
      $region44: #{tpu_custom_call.1} parent=5 // pred_fallthru
        _
    $region6: #{tpu_custom_call.1} parent=1 // loop_footer
      %s19 = sadd.s32 1, %s15
    $region7: #{tpu_custom_call.1} parent=1 // loop_footer_branch
      %14 = sbr.rel target = $region3
    $region8: #{tpu_custom_call.1} parent=1 // loop_exit
      _
    %319 = vsyncpa [#allocation3], 1
    %s320 = scalar_lea.sflag [#allocation3], 1
    %321 = vsyncpa %s320, 1
    %322 = vsyncpa [#allocation4], 1
    %s323 = scalar_lea.sflag [#allocation4], 1
    %324 = vsyncpa %s323, 1

</llo_original>
